<compile_context>
chip_gen: v5e
topology: v5e:2x2
jax: 0.10.0
libtpu: 0.0.40
codegen_flags: <defaults>
</compile_context>

<pallas_src>
import jax
import jax.numpy as jnp
from jax.experimental import pallas as pl
from jax.experimental.pallas import tpu as pltpu

# Defaults from torchvision / the original module.
IMAGENET_MEAN = [0.485, 0.456, 0.406]
IMAGENET_STD = [0.229, 0.224, 0.225]


def _imgnorm_kernel(scale_ref, bias_ref, x_ref, o_ref):
    # scale_ref, bias_ref: (block_rows, 1) f32 per-row affine (broadcast over lanes)
    # x_ref, o_ref       : (block_rows, block_cols) lane-dense tiles
    x = x_ref[...].astype(jnp.float32)
    o_ref[...] = (x * scale_ref[...] + bias_ref[...]).astype(o_ref.dtype)


def _pick_blocks(rows, cols, itemsize):
    """Choose (block_rows, block_cols) targeting ~4 MiB of input per block.

    Constraints honored: last block dim is a multiple of 128 or the full array
    extent; second-to-last block dim is a multiple of 8 or the full extent.
    """
    target_elems = max(128, (4 * 1024 * 1024) // itemsize)
    if cols <= target_elems:
        # Take full rows of the flattened view (lane-dense when H*W % 128 == 0).
        bc = cols
        rows_budget = max(1, target_elems // max(bc, 1))
        if rows_budget >= rows:
            br = rows                       # full extent
        else:
            br = max(8, (rows_budget // 8) * 8)
            br = min(br, rows) if rows % 8 == 0 else br
    else:
        # Very large spatial planes: tile the lane axis with a big multiple of 128.
        br = rows if rows < 8 else 8
        bc = max(128, (target_elems // max(br, 1) // 128) * 128)
        bc = min(bc, ((cols + 127) // 128) * 128)
    return br, bc


def image_normalization(img, mean=IMAGENET_MEAN, std=IMAGENET_STD, reverse=False):
    """Equivalent to ImageNormalization.forward.

    img: (N, C, H, W) or (C, H, W) array (float; integer inputs are cast to f32).
    """
    original_shape = img.shape
    if img.ndim == 3:
        img = img[None]  # unsqueeze(0)
    assert img.ndim == 4, "expected 3D or 4D input"

    N, C, H, W = img.shape
    assert len(mean) == C and len(std) == C, "mean/std length must match channels"

    # Match the float semantics of the PyTorch reference for non-float inputs.
    if not jnp.issubdtype(img.dtype, jnp.floating):
        img = img.astype(jnp.float32)
    dtype = img.dtype

    # Precompute the per-channel affine so the kernel is a single FMA.
    mean_f = jnp.asarray(mean, jnp.float32)
    std_f = jnp.asarray(std, jnp.float32)
    if reverse:
        scale_c = std_f
        bias_c = mean_f
    else:
        scale_c = 1.0 / std_f
        bias_c = -mean_f / std_f

    rows = N * C
    cols = H * W
    # Per-row (row = one (n, c) plane) f32 scale/bias columns, broadcast over lanes.
    scale_rows = jnp.tile(scale_c, N).reshape(rows, 1)
    bias_rows = jnp.tile(bias_c, N).reshape(rows, 1)

    x2d = img.reshape(rows, cols)
    br, bc = _pick_blocks(rows, cols, jnp.dtype(dtype).itemsize)
    grid = (pl.cdiv(rows, br), pl.cdiv(cols, bc))

    out2d = pl.pallas_call(
        _imgnorm_kernel,
        out_shape=jax.ShapeDtypeStruct((rows, cols), dtype),
        grid=grid,
        in_specs=[
            pl.BlockSpec((br, 1), lambda i, j: (i, 0)),   # scale (f32)
            pl.BlockSpec((br, 1), lambda i, j: (i, 0)),   # bias  (f32)
            pl.BlockSpec((br, bc), lambda i, j: (i, j)),  # img (flattened)
        ],
        out_specs=pl.BlockSpec((br, bc), lambda i, j: (i, j)),
        compiler_params=pltpu.CompilerParams(
            dimension_semantics=("parallel", "parallel"),
            # Explicit, conservative limit: safe on v7x (64 MiB physical) as well.
            vmem_limit_bytes=32 * 1024 * 1024,
        ),
    )(scale_rows, bias_rows, x2d)

    return out2d.reshape(original_shape)


if __name__ == "__main__":
    key = jax.random.PRNGKey(0)
    # Small NCHW input: batch=2, channels=3 (ImageNet defaults), spatial=16.
    x = jax.random.uniform(key, (2, 3, 16, 16), dtype=jnp.float32)

    # Forward normalization.
    y = image_normalization(x, reverse=False)
    y = jax.block_until_ready(y)

    # Reference in plain JAX.
    mean_b = jnp.asarray(IMAGENET_MEAN, jnp.float32).reshape(1, -1, 1, 1)
    std_b = jnp.asarray(IMAGENET_STD, jnp.float32).reshape(1, -1, 1, 1)
    y_ref = (x - mean_b) / std_b
    assert jnp.allclose(y, y_ref, atol=1e-5, rtol=1e-5), "forward mismatch"

    # Reverse (denormalize) should round-trip back to x.
    x_rec = image_normalization(y, reverse=True)
    x_rec = jax.block_until_ready(x_rec)
    assert jnp.allclose(x_rec, x, atol=1e-5, rtol=1e-5), "reverse mismatch"

    # Also exercise the 3-D (C, H, W) path.
    y3 = image_normalization(x[0], reverse=False)
    y3 = jax.block_until_ready(y3)
    assert y3.shape == (3, 16, 16)
    assert jnp.allclose(y3, y_ref[0], atol=1e-5, rtol=1e-5), "3D path mismatch"

    # Custom mean/std with a different channel count (generality check).
    x4 = jax.random.normal(jax.random.PRNGKey(1), (2, 4, 16, 16), dtype=jnp.float32)
    m4 = [0.1, 0.2, 0.3, 0.4]
    s4 = [0.5, 0.6, 0.7, 0.8]
    y4 = jax.block_until_ready(image_normalization(x4, mean=m4, std=s4))
    m4b = jnp.asarray(m4, jnp.float32).reshape(1, -1, 1, 1)
    s4b = jnp.asarray(s4, jnp.float32).reshape(1, -1, 1, 1)
    assert jnp.allclose(y4, (x4 - m4b) / s4b, atol=1e-5, rtol=1e-5), "4ch mismatch"

    print("KERNEL_OK")
</pallas_src>

<mosaic_0001>
module attributes {stable_mosaic.version = 11 : i64} {
  func.func @_imgnorm_kernel(%arg0: i32, %arg1: i32, %arg2: memref<6x1xf32, #tpu.memory_space<vmem>>, %arg3: memref<6x1xf32, #tpu.memory_space<vmem>>, %arg4: memref<6x256xf32, #tpu.memory_space<vmem>>, %arg5: memref<6x256xf32, #tpu.memory_space<vmem>>) attributes {dimension_semantics = [#tpu.dimension_semantics<parallel>, #tpu.dimension_semantics<parallel>], iteration_bounds = array<i64: 1, 1>, scalar_prefetch = 0 : i64, scratch_operands = 0 : i64, tpu.core_type = #tpu.core_type<tc>, window_params = [{transform_indices = @transform_0, window_bounds = array<i64: 6, 1>}, {transform_indices = @transform_1, window_bounds = array<i64: 6, 1>}, {transform_indices = @transform_2, window_bounds = array<i64: 6, 256>}, {transform_indices = @transform_3, window_bounds = array<i64: 6, 256>}]} {
    %c0 = arith.constant 0 : index
    %c0_0 = arith.constant 0 : index
    %0 = vector.load %arg4[%c0, %c0_0] : memref<6x256xf32, #tpu.memory_space<vmem>>, vector<6x256xf32>
    %c0_1 = arith.constant 0 : index
    %c0_2 = arith.constant 0 : index
    %1 = vector.load %arg2[%c0_1, %c0_2] : memref<6x1xf32, #tpu.memory_space<vmem>>, vector<6x1xf32>
    %2 = vector.broadcast %1 : vector<6x1xf32> to vector<6x256xf32>
    %3 = arith.mulf %0, %2 : vector<6x256xf32>
    %c0_3 = arith.constant 0 : index
    %c0_4 = arith.constant 0 : index
    %4 = vector.load %arg3[%c0_3, %c0_4] : memref<6x1xf32, #tpu.memory_space<vmem>>, vector<6x1xf32>
    %5 = vector.broadcast %4 : vector<6x1xf32> to vector<6x256xf32>
    %6 = arith.addf %3, %5 : vector<6x256xf32>
    %c0_5 = arith.constant 0 : index
    %c0_6 = arith.constant 0 : index
    %7 = vector.load %arg5[%c0_5, %c0_6] : memref<6x256xf32, #tpu.memory_space<vmem>>, vector<6x256xf32>
    tpu.vector_store %arg5[%c0_5, %c0_6], %6 {strides = array<i32>} : memref<6x256xf32, #tpu.memory_space<vmem>>, vector<6x256xf32>,
    return
  }
  func.func @transform_0(%arg0: i32, %arg1: i32) -> (i32, i32) {
    %c0_i32 = arith.constant 0 : i32
    %c0_i32_0 = arith.constant 0 : i32
    return %arg0, %c0_i32 : i32, i32
  }
  func.func @transform_1(%arg0: i32, %arg1: i32) -> (i32, i32) {
    %c0_i32 = arith.constant 0 : i32
    %c0_i32_0 = arith.constant 0 : i32
    return %arg0, %c0_i32 : i32, i32
  }
  func.func @transform_2(%arg0: i32, %arg1: i32) -> (i32, i32) {
    %c0_i32 = arith.constant 0 : i32
    return %arg0, %arg1 : i32, i32
  }
  func.func @transform_3(%arg0: i32, %arg1: i32) -> (i32, i32) {
    %c0_i32 = arith.constant 0 : i32
    return %arg0, %arg1 : i32, i32
  }
}

</mosaic_0001>

<llo_original>
// kernel: tpu_custom_call.1
$region0: #{tpu_custom_call.1}
  #allocation0 [shape = 'u32[]', space=smem, size = 0x4, offset = 0x4, fixed_abs, tag = 'smem constant byte address 0x4 - core index']
  #allocation1 [shape = 'u32[72,128]{1,0:T(1,128)}', space=vmem, size = 0x9000, scoped, tag = 'internal scratch']
  %s0 = inlined_call_operand.vmem [shape: f32[6,1], index: 0, kind: input, shape index: {}]
  %s1 = inlined_call_operand.vmem [shape: f32[6,1], index: 1, kind: input, shape index: {}]
  %s2 = inlined_call_operand.vmem [shape: f32[6,256], index: 2, kind: input, shape index: {}]
  %s3 = inlined_call_operand.hbm [shape: f32[6,256], index: 3, kind: output, shape index: {}]
  %s4 = sld [smem:[#allocation0]]
  $region22: #{tpu_custom_call.1} parent=0
    _
  %s6 = ssub.s32 1, %s4
  %s7 = scalar_select 0, %s6, %s4
  $region1: #{tpu_custom_call.1} parent=0
    #allocation2 [shape = 'u8[8192]{0}', space=vmem, size = 0x2000, scoped, tag = 'output window, operand 0, single buffered']
    #allocation3 [shape = 's32[1]{0}', space=sflag, size = 0x4, scoped, tag = 'scoped memory for tpu_custom_call.1']
    %8 = vsyncpa [#allocation3], 0
    // Predicated region
    $region2: #{tpu_custom_call.1} parent=1 // pred_check
      _
    $region3: #{tpu_custom_call.1} parent=1 // pred_check_branch
      %10 = sbr.rel (0) target = $region5
    $region4: #{tpu_custom_call.1} parent=1 // pred_region
      _
    $region5: #{tpu_custom_call.1} parent=1 // pred_fallthru
      _
    // Predicated region
    $region6: #{tpu_custom_call.1} parent=1 // pred_check
      _
    $region7: #{tpu_custom_call.1} parent=1 // pred_check_branch
      %12 = sbr.rel (0) target = $region9
    $region8: #{tpu_custom_call.1} parent=1 // pred_region
      _
    $region9: #{tpu_custom_call.1} parent=1 // pred_fallthru
      _
    // Predicated region
    $region10: #{tpu_custom_call.1} parent=1 // pred_check
      _
    $region11: #{tpu_custom_call.1} parent=1 // pred_check_branch
      %14 = sbr.rel (0) target = $region13
    $region12: #{tpu_custom_call.1} parent=1 // pred_region
      _
    $region13: #{tpu_custom_call.1} parent=1 // pred_fallthru
      _
    %v15 = vld [vmem:[%s2] sm:$0x3f]
    %v16 = vld [vmem:[%s2 + $0x8] sm:$0x3f]
    %v17 = vld [vmem:[%s0] sm:$0x3f]
    %19 = vset.pattern.permute.xlu0 0
    %20 = vperm.xlu0 %19, %v17
    %v21 = vpop.permute.xlu0 %20
    %v23 = vmul.f32 %v15, %v21
    %v24 = vmul.f32 %v16, %v21
    %v25 = vld [vmem:[%s1] sm:$0x3f]
    %27 = vset.pattern.permute.xlu0 0
    %28 = vperm.xlu0 %27, %v25
    %v29 = vpop.permute.xlu0 %28
    %v31 = vadd.f32 %v23, %v29
    %v32 = vadd.f32 %v24, %v29
    %33 = vst [vmem:[#allocation2] sm:$0x3f] %v31
    %34 = vst [vmem:[#allocation2 + $0x8] sm:$0x3f] %v32
    // Predicated region
    $region14: #{tpu_custom_call.1} parent=1 // pred_check
      _
    $region15: #{tpu_custom_call.1} parent=1 // pred_check_branch
      %36 = sbr.rel (0) target = $region17
    $region16: #{tpu_custom_call.1} parent=1 // pred_region
      %38 = vsyncadd [#allocation3], 0
      %s40 = sshll.u32 [#allocation2], 4
      %s41 = int_to_ptr.vmem [resolvable:$true] %s40
      %s42 = sshll.u32 %s3, 4
      %s43 = int_to_ptr.hbm [resolvable:$true] %s42
      %45 = dma.vmem_to_hbm [thread:$0]  %s41, 256, %s43, [#allocation3]
    $region17: #{tpu_custom_call.1} parent=1 // pred_fallthru
      _
    // Predicated region
    $region18: #{tpu_custom_call.1} parent=1 // pred_check
      _
    $region19: #{tpu_custom_call.1} parent=1 // pred_check_branch
      %47 = sbr.rel (0) target = $region21
    $region20: #{tpu_custom_call.1} parent=1 // pred_region
      %49 = dma.done [#allocation3], 256
    $region21: #{tpu_custom_call.1} parent=1 // pred_fallthru
      _
    %50 = vsyncpa [#allocation3], 1

</llo_original>
